<compile_context>
chip_gen: v7x
topology: tpu7x:2x2x1
jax: 0.10.0
libtpu: 0.0.40
codegen_flags: <defaults>
</compile_context>

<pallas_src>
import functools

import jax
import jax.numpy as jnp
from jax import lax
from jax.experimental import pallas as pl
from jax.experimental.pallas import tpu as pltpu


def _round_up(x: int, m: int) -> int:
    return (x + m - 1) // m * m


def _matmul_xwt(x, w):
    """x @ w.T with f32 MXU accumulation; x: (m, k), w: (n, k)."""
    return lax.dot_general(
        x, w,
        dimension_numbers=(((1,), (1,)), ((), ())),
        preferred_element_type=jnp.float32,
    )


# ---------------------------------------------------------------------------
# Kernels
# ---------------------------------------------------------------------------
def _fc_single_kernel(x_ref, w_ref, b_ref, o_ref, *, cast_bf16):
    """Whole problem (or one (tm, tn) tile holding the full K) in one shot."""
    x = x_ref[...]
    w = w_ref[...]
    if cast_bf16:
        x = x.astype(jnp.bfloat16)
        w = w.astype(jnp.bfloat16)
    acc = _matmul_xwt(x, w)
    o_ref[...] = (acc + b_ref[...]).astype(o_ref.dtype)


def _fc_acc_kernel(x_ref, w_ref, b_ref, o_ref, acc_ref, *, cast_bf16):
    """One (tm, tn) output tile, reduced over the innermost K grid axis."""
    k = pl.program_id(2)

    @pl.when(k == 0)
    def _():
        acc_ref[...] = jnp.zeros_like(acc_ref)

    x = x_ref[...]
    w = w_ref[...]
    if cast_bf16:
        x = x.astype(jnp.bfloat16)
        w = w.astype(jnp.bfloat16)
    acc_ref[...] += _matmul_xwt(x, w)

    @pl.when(k == pl.num_programs(2) - 1)
    def _():
        o_ref[...] = (acc_ref[...] + b_ref[...]).astype(o_ref.dtype)


# ---------------------------------------------------------------------------
# Wrapper
# ---------------------------------------------------------------------------
def _vmem_cap_bytes() -> int:
    """Chip-aware scoped-VMEM cap (v7x has only 64 MiB physical per TC)."""
    try:
        return int(pltpu.get_tpu_info().vmem_capacity_bytes * 0.7)
    except Exception:
        return 32 * 1024 * 1024


def fcnet_1_forward(x, w, b, *, bf16_matmul=False,
                    tm_max=512, tn_max=512, tk_max=512):
    """y = x @ w.T + b  (torch.nn.Linear forward).

    x: (B, F), w: (O, F) in torch Linear layout, b: (O,).  Returns (B, O).
    bf16_matmul=True trades exact f32 parity for bf16 MXU operands; the cast
    happens per-tile inside the kernel, never as a separate HBM pass.
    """
    B, F = x.shape
    O, Fw = w.shape
    assert Fw == F, (x.shape, w.shape)
    out_dtype = x.dtype

    b2d = b.reshape(1, O)
    cost = pl.CostEstimate(
        flops=2 * B * F * O,
        transcendentals=0,
        bytes_accessed=(x.size * x.dtype.itemsize
                        + w.size * w.dtype.itemsize
                        + b.size * b.dtype.itemsize
                        + B * O * jnp.dtype(out_dtype).itemsize),
    )

    # ---- Small path: whole problem fits in one tile -> one grid point,
    # full-array blocks (no HBM padding), no accumulator, no init/finalize.
    if B <= tm_max and F <= tk_max and O <= tn_max:
        kernel = functools.partial(_fc_single_kernel, cast_bf16=bf16_matmul)
        return pl.pallas_call(
            kernel,
            out_shape=jax.ShapeDtypeStruct((B, O), out_dtype),
            grid=(1,),
            in_specs=[
                pl.BlockSpec((B, F), lambda i: (0, 0)),   # x, native layout
                pl.BlockSpec((O, F), lambda i: (0, 0)),   # W, native (O, F)
                pl.BlockSpec((1, O), lambda i: (0, 0)),   # bias row
            ],
            out_specs=pl.BlockSpec((B, O), lambda i: (0, 0)),
            cost_estimate=cost,
        )(x, w, b2d)

    # ---- Tiled path (large shapes).
    tm = min(tm_max, _round_up(B, 8))
    tn = min(tn_max, _round_up(O, 128))
    tk = min(tk_max, _round_up(F, 128))

    Bp, Op, Fp = _round_up(B, tm), _round_up(O, tn), _round_up(F, tk)
    # Pad only dims that are actually ragged (no-op for aligned big shapes).
    if (Bp, Fp) != (B, F):
        x = jnp.pad(x, ((0, Bp - B), (0, Fp - F)))
    if (Op, Fp) != (O, F):
        w = jnp.pad(w, ((0, Op - O), (0, Fp - F)))
    if Op != O:
        b2d = jnp.pad(b2d, ((0, 0), (0, Op - O)))

    nm, nn, nk = Bp // tm, Op // tn, Fp // tk

    # Double-buffered operands + f32 accumulator, with headroom, chip-capped.
    vmem_need = (2 * (tm * tk + tn * tk) * x.dtype.itemsize
                 + 2 * (tn * 4 + tm * tn * 4) + tm * tn * 4)
    vmem_limit = int(min(max(2 * vmem_need, 8 * 1024 * 1024), _vmem_cap_bytes()))

    if nk == 1:
        # Single K tile: 2-D grid, no scratch, direct store.
        kernel = functools.partial(_fc_single_kernel, cast_bf16=bf16_matmul)
        yp = pl.pallas_call(
            kernel,
            out_shape=jax.ShapeDtypeStruct((Bp, Op), out_dtype),
            grid=(nm, nn),
            in_specs=[
                pl.BlockSpec((tm, tk), lambda i, j: (i, 0)),
                pl.BlockSpec((tn, tk), lambda i, j: (j, 0)),
                pl.BlockSpec((1, tn), lambda i, j: (0, j)),
            ],
            out_specs=pl.BlockSpec((tm, tn), lambda i, j: (i, j)),
            compiler_params=pltpu.CompilerParams(
                dimension_semantics=("parallel", "parallel"),
                vmem_limit_bytes=vmem_limit,
            ),
            cost_estimate=cost,
        )(x, w, b2d)
    else:
        x_spec = pl.BlockSpec((tm, tk), lambda i, j, k: (i, k))
        w_map = lambda i, j, k: (j, k)          # W stays (O, F); no HBM transpose
        if nk >= 8:
            # Deeper buffering on the streamed weights for long K reductions.
            w_spec = pl.BlockSpec((tn, tk), w_map, pipeline_mode=pl.Buffered(3))
        else:
            w_spec = pl.BlockSpec((tn, tk), w_map)
        b_spec = pl.BlockSpec((1, tn), lambda i, j, k: (0, j))
        o_spec = pl.BlockSpec((tm, tn), lambda i, j, k: (i, j))

        kernel = functools.partial(_fc_acc_kernel, cast_bf16=bf16_matmul)
        yp = pl.pallas_call(
            kernel,
            out_shape=jax.ShapeDtypeStruct((Bp, Op), out_dtype),
            grid=(nm, nn, nk),
            in_specs=[x_spec, w_spec, b_spec],
            out_specs=o_spec,
            scratch_shapes=[pltpu.VMEM((tm, tn), jnp.float32)],
            compiler_params=pltpu.CompilerParams(
                dimension_semantics=("parallel", "parallel", "arbitrary"),
                vmem_limit_bytes=vmem_limit,
            ),
            cost_estimate=cost,
        )(x, w, b2d)

    if (Bp, Op) != (B, O):
        yp = yp[:B, :O]
    return yp


if __name__ == "__main__":
    # Module-consistent small shapes: batch=8, feature_channel=32, output_channel=16.
    batch, feature_channel, output_channel = 8, 32, 16

    key = jax.random.PRNGKey(0)
    kx, kw, kb = jax.random.split(key, 3)

    # torch.nn.Linear-style init: U(-1/sqrt(F), 1/sqrt(F)).
    bound = 1.0 / jnp.sqrt(jnp.float32(feature_channel))
    w = jax.random.uniform(kw, (output_channel, feature_channel),
                           jnp.float32, -bound, bound)   # torch layout (O, F)
    b = jax.random.uniform(kb, (output_channel,), jnp.float32, -bound, bound)
    x = jax.random.normal(kx, (batch, feature_channel), jnp.float32)

    y = fcnet_1_forward(x, w, b)
    y = jax.block_until_ready(y)
    assert y.shape == (batch, output_channel)

    y_ref = x @ w.T + b
    assert jnp.allclose(y, y_ref, atol=2e-2, rtol=2e-2), float(
        jnp.max(jnp.abs(y - y_ref)))

    # Also exercise the tiled (multi-K-tile) path with forced-small tile caps.
    B2, F2, O2 = 64, 512, 256
    k2x, k2w, k2b = jax.random.split(jax.random.PRNGKey(0), 3)
    bound2 = 1.0 / jnp.sqrt(jnp.float32(F2))
    w2 = jax.random.uniform(k2w, (O2, F2), jnp.float32, -bound2, bound2)
    b2 = jax.random.uniform(k2b, (O2,), jnp.float32, -bound2, bound2)
    x2 = jax.random.normal(k2x, (B2, F2), jnp.float32)

    y2 = fcnet_1_forward(x2, w2, b2, tm_max=64, tn_max=128, tk_max=128)
    y2 = jax.block_until_ready(y2)
    y2_ref = jnp.matmul(x2, w2.T, precision=jax.lax.Precision.HIGHEST) + b2
    # Loose sanity tolerance: any tiling/indexing bug would produce O(1) errors.
    assert jnp.allclose(y2, y2_ref, atol=5e-2, rtol=5e-2), float(
        jnp.max(jnp.abs(y2 - y2_ref)))

    print("KERNEL_OK")
</pallas_src>

<mosaic_0001>
module attributes {stable_mosaic.version = 11 : i64} {
  func.func @_fc_single_kernel(%arg0: i32, %arg1: memref<8x32xf32, #tpu.memory_space<vmem>>, %arg2: memref<16x32xf32, #tpu.memory_space<vmem>>, %arg3: memref<1x16xf32, #tpu.memory_space<vmem>>, %arg4: memref<8x16xf32, #tpu.memory_space<vmem>>) attributes {dimension_semantics = [#tpu.dimension_semantics<arbitrary>], iteration_bounds = array<i64: 1>, scalar_prefetch = 0 : i64, scratch_operands = 0 : i64, tpu.core_type = #tpu.core_type<tc>, window_params = [{pipeline_mode = #tpu.pipeline_mode<synchronous>, transform_indices = @transform_0, window_bounds = array<i64: 8, 32>}, {pipeline_mode = #tpu.pipeline_mode<synchronous>, transform_indices = @transform_1, window_bounds = array<i64: 16, 32>}, {pipeline_mode = #tpu.pipeline_mode<synchronous>, transform_indices = @transform_2, window_bounds = array<i64: 1, 16>}, {pipeline_mode = #tpu.pipeline_mode<synchronous>, transform_indices = @transform_3, window_bounds = array<i64: 8, 16>}]} {
    %c0 = arith.constant 0 : index
    %c0_0 = arith.constant 0 : index
    %0 = vector.load %arg1[%c0, %c0_0] : memref<8x32xf32, #tpu.memory_space<vmem>>, vector<8x32xf32>
    %c0_1 = arith.constant 0 : index
    %c0_2 = arith.constant 0 : index
    %1 = vector.load %arg2[%c0_1, %c0_2] : memref<16x32xf32, #tpu.memory_space<vmem>>, vector<16x32xf32>
    %cst = arith.constant dense<0.000000e+00> : vector<8x16xf32>
    %2 = tpu.matmul %0, %1, %cst {dimension_numbers = #tpu.dot_dimension_numbers<[1], [1], [0], [0], [0, 0, 1, 0], [], []>} : vector<8x32xf32>, vector<16x32xf32>, vector<8x16xf32> -> vector<8x16xf32>
    %c0_3 = arith.constant 0 : index
    %c0_4 = arith.constant 0 : index
    %3 = vector.load %arg3[%c0_3, %c0_4] : memref<1x16xf32, #tpu.memory_space<vmem>>, vector<1x16xf32>
    %4 = vector.broadcast %3 : vector<1x16xf32> to vector<8x16xf32>
    %5 = arith.addf %2, %4 : vector<8x16xf32>
    %c0_5 = arith.constant 0 : index
    %c0_6 = arith.constant 0 : index
    %6 = vector.load %arg4[%c0_5, %c0_6] : memref<8x16xf32, #tpu.memory_space<vmem>>, vector<8x16xf32>
    tpu.vector_store %arg4[%c0_5, %c0_6], %5 {strides = array<i32>} : memref<8x16xf32, #tpu.memory_space<vmem>>, vector<8x16xf32>,
    return
  }
  func.func @transform_0(%arg0: i32) -> (i32, i32) {
    %c0_i32 = arith.constant 0 : i32
    %c0_i32_0 = arith.constant 0 : i32
    %c0_i32_1 = arith.constant 0 : i32
    return %c0_i32, %c0_i32_0 : i32, i32
  }
  func.func @transform_1(%arg0: i32) -> (i32, i32) {
    %c0_i32 = arith.constant 0 : i32
    %c0_i32_0 = arith.constant 0 : i32
    %c0_i32_1 = arith.constant 0 : i32
    return %c0_i32, %c0_i32_0 : i32, i32
  }
  func.func @transform_2(%arg0: i32) -> (i32, i32) {
    %c0_i32 = arith.constant 0 : i32
    %c0_i32_0 = arith.constant 0 : i32
    %c0_i32_1 = arith.constant 0 : i32
    return %c0_i32, %c0_i32_0 : i32, i32
  }
  func.func @transform_3(%arg0: i32) -> (i32, i32) {
    %c0_i32 = arith.constant 0 : i32
    %c0_i32_0 = arith.constant 0 : i32
    %c0_i32_1 = arith.constant 0 : i32
    return %c0_i32, %c0_i32_0 : i32, i32
  }
}

</mosaic_0001>

<llo_original>
// kernel: tpu_custom_call.1
$region0: #{tpu_custom_call.1}
  #allocation0 [shape = 'u32[]', space=smem, size = 0x4, offset = 0x4, fixed_abs, tag = 'smem constant byte address 0x4 - core index']
  #allocation1 [shape = 'u32[144,128]{1,0:T(1,128)}', space=vmem, size = 0x12000, scoped, tag = 'internal scratch']
  %s0 = inlined_call_operand.hbm [shape: f32[8,32], index: 0, kind: input, shape index: {}]
  %s1 = inlined_call_operand.hbm [shape: f32[16,32], index: 1, kind: input, shape index: {}]
  %s2 = inlined_call_operand.vmem [shape: f32[1,16], index: 2, kind: input, shape index: {}]
  %s3 = inlined_call_operand.hbm [shape: f32[8,16], index: 3, kind: output, shape index: {}]
  %s4 = sld [smem:[#allocation0]]
  $region30: #{tpu_custom_call.1} parent=0
    _
  %s6 = ssub.s32 1, %s4
  %s7 = scalar_select 0, %s6, %s4
  $region1: #{tpu_custom_call.1} parent=0
    #allocation2 [shape = 'u8[4096]{0}', space=vmem, size = 0x1000, scoped, tag = 'input window, operand 0, single buffered']
    #allocation3 [shape = 's32[1]{0}', space=sflag, size = 0x4, scoped, tag = 'scoped memory for tpu_custom_call.1']
    #allocation4 [shape = 's32[1]{0}', space=sflag, size = 0x4, scoped, tag = 'scoped memory for tpu_custom_call.1']
    #allocation5 [shape = 'u8[8192]{0}', space=vmem, size = 0x2000, scoped, tag = 'input window, operand 1, single buffered']
    #allocation6 [shape = 's32[1]{0}', space=sflag, size = 0x4, scoped, tag = 'scoped memory for tpu_custom_call.1']
    #allocation7 [shape = 'u8[4096]{0}', space=vmem, size = 0x1000, scoped, tag = 'output window, operand 0, single buffered']
    %8 = vsyncpa [#allocation3], 0
    %9 = vsyncpa [#allocation6], 0
    %10 = vsyncpa [#allocation4], 0
    // Predicated region
    $region2: #{tpu_custom_call.1} parent=1 // pred_check
      _
    $region3: #{tpu_custom_call.1} parent=1 // pred_check_branch
      %12 = sbr.rel (0) target = $region5
    $region4: #{tpu_custom_call.1} parent=1 // pred_region
      %s14 = ssub.s32 128, 128
      %15 = vsyncadd [#allocation3], %s14
      %s17 = sshll.u32 [#allocation2], 4
      %s18 = int_to_ptr.vmem [resolvable:$true] %s17
      %20 = dma.hbm_to_vmem [thread:$0]  %s0, 128, %s18, [#allocation3]
    $region5: #{tpu_custom_call.1} parent=1 // pred_fallthru
      _
    // Predicated region
    $region6: #{tpu_custom_call.1} parent=1 // pred_check
      _
    $region7: #{tpu_custom_call.1} parent=1 // pred_check_branch
      %22 = sbr.rel (0) target = $region9
    $region8: #{tpu_custom_call.1} parent=1 // pred_region
      %s24 = ssub.s32 256, 256
      %25 = vsyncadd [#allocation6], %s24
      %s26 = sshll.u32 [#allocation5], 4
      %s27 = int_to_ptr.vmem [resolvable:$true] %s26
      %32 = dma.hbm_to_vmem [thread:$0]  %s1, 256, %s27, [#allocation6], 128, 128, 8
    $region9: #{tpu_custom_call.1} parent=1 // pred_fallthru
      _
    // Predicated region
    $region10: #{tpu_custom_call.1} parent=1 // pred_check
      _
    $region11: #{tpu_custom_call.1} parent=1 // pred_check_branch
      %34 = sbr.rel (0) target = $region13
    $region12: #{tpu_custom_call.1} parent=1 // pred_region
      _
    $region13: #{tpu_custom_call.1} parent=1 // pred_fallthru
      _
    // Predicated region
    $region14: #{tpu_custom_call.1} parent=1 // pred_check
      _
    $region15: #{tpu_custom_call.1} parent=1 // pred_check_branch
      %36 = sbr.rel (0) target = $region17
    $region16: #{tpu_custom_call.1} parent=1 // pred_region
      %37 = dma.done [#allocation3], 128
    $region17: #{tpu_custom_call.1} parent=1 // pred_fallthru
      _
    // Predicated region
    $region18: #{tpu_custom_call.1} parent=1 // pred_check
      _
    $region19: #{tpu_custom_call.1} parent=1 // pred_check_branch
      %39 = sbr.rel (0) target = $region21
    $region20: #{tpu_custom_call.1} parent=1 // pred_region
      %40 = dma.done [#allocation6], 256
    $region21: #{tpu_custom_call.1} parent=1 // pred_fallthru
      _
    %v41 = vld [vmem:[#allocation2] sm:$0xff]
    %v42 = vld [vmem:[#allocation5] sm:$0xff]
    %v43 = vld [vmem:[#allocation5 + $0x8] sm:$0xff]
    %v44 = vld [vmem:[%s2] sm:$0x1]
    %v46 = vlaneseq
    %v47 = vshrl.u32 %v46, 7
    %v48 = vsub.s32 0, %v47
    %v49 = vrot.slane %v44, %v48
    %vm51 = vcmask 261120
    %v53 = vsel %vm51, %v41, 0
    %v56 = vsel %vm51, %v42, 0
    %v59 = vsel %vm51, %v43, 0
    %61 = vmatprep.subr.mxu0 0.0
    %62 = vmatpush1.xpose.msra.mxu0 %v56
    %63 = vmatprep.subr.mxu0 0.0
    %64 = vmatpush1.xpose.msra.mxu0 %v59
    %65 = vmatprep.subr.mxu0 0.0
    %66 = vmatpush1.xpose.msra.mxu0 0.0
    %67 = vmatprep.subr.mxu0 0.0
    %68 = vmatpush1.xpose.msra.mxu0 0.0
    %69 = vmatprep.subr.mxu0 0.0
    %70 = vmatpush1.xpose.msra.mxu0 0.0
    %71 = vmatprep.subr.mxu0 0.0
    %72 = vmatpush1.xpose.msra.mxu0 0.0
    %73 = vmatprep.subr.mxu0 0.0
    %74 = vmatpush1.xpose.msra.mxu0 0.0
    %75 = vmatprep.subr.mxu0 0.0
    %76 = vmatpush1.xpose.msra.mxu0 0.0
    %77 = vmatprep.subr.mxu0 0.0
    %78 = vmatpush1.xpose.msra.mxu0 0.0
    %79 = vmatprep.subr.mxu0 0.0
    %80 = vmatpush1.xpose.msra.mxu0 0.0
    %81 = vmatprep.subr.mxu0 0.0
    %82 = vmatpush1.xpose.msra.mxu0 0.0
    %83 = vmatprep.subr.mxu0 0.0
    %84 = vmatpush1.xpose.msra.mxu0 0.0
    %85 = vmatprep.subr.mxu0 0.0
    %86 = vmatpush1.xpose.msra.mxu0 0.0
    %87 = vmatprep.subr.mxu0 0.0
    %88 = vmatpush1.xpose.msra.mxu0 0.0
    %89 = vmatprep.subr.mxu0 0.0
    %90 = vmatpush1.xpose.msra.mxu0 0.0
    %91 = vmatprep.subr.mxu0 0.0
    %92 = vmatpush1.xpose.msra.mxu0 0.0
    %93 = vmatprep.subr.mxu0 0.0
    %94 = vmatpush1.xpose.msra.mxu0 0.0
    %95 = vmatprep.subr.mxu0 0.0
    %96 = vmatpush1.xpose.msra.mxu0 0.0
    %97 = vmatprep.subr.mxu0 0.0
    %98 = vmatpush1.xpose.msra.mxu0 0.0
    %99 = vmatprep.subr.mxu0 0.0
    %100 = vmatpush1.xpose.msra.mxu0 0.0
    %101 = vmatprep.subr.mxu0 0.0
    %102 = vmatpush1.xpose.msra.mxu0 0.0
    %103 = vmatprep.subr.mxu0 0.0
    %104 = vmatpush1.xpose.msra.mxu0 0.0
    %105 = vmatprep.subr.mxu0 0.0
    %106 = vmatpush1.xpose.msra.mxu0 0.0
    %107 = vmatprep.subr.mxu0 0.0
    %108 = vmatpush1.xpose.msra.mxu0 0.0
    %109 = vmatprep.subr.mxu0 0.0
    %110 = vmatpush1.xpose.msra.mxu0 0.0
    %111 = vmatprep.subr.mxu0 0.0
    %112 = vmatpush1.xpose.msra.mxu0 0.0
    %113 = vmatprep.subr.mxu0 0.0
    %114 = vmatpush1.xpose.msra.mxu0 0.0
    %115 = vmatprep.subr.mxu0 0.0
    %116 = vmatpush1.xpose.msra.mxu0 0.0
    %117 = vmatprep.subr.mxu0 0.0
    %118 = vmatpush1.xpose.msra.mxu0 0.0
    %119 = vmatprep.subr.mxu0 0.0
    %120 = vmatpush1.xpose.msra.mxu0 0.0
    %121 = vmatprep.subr.mxu0 0.0
    %122 = vmatpush1.xpose.msra.mxu0 0.0
    %123 = vmatprep.subr.mxu0 0.0
    %124 = vmatpush1.xpose.msra.mxu0 0.0
    %125 = vmatprep.mubr.f32.mxu0 0.0
    %126 = vmatmul.mubr.f32.gmra.mrb[0].mxu0 %v53
    %v127 = vpop.f32.mrb[0].mxu0
    %v128 = vadd.f32 %v49, %v127
    %v129 = vpop.f32.mrb[0].mxu0
    %130 = vdwg.mxu0
    %vm131 = vcmask 130048
    %132 = vst.msk [vmem:[#allocation7] sm:$0xff] %vm131, %v128
    // Predicated region
    $region22: #{tpu_custom_call.1} parent=1 // pred_check
      _
    $region23: #{tpu_custom_call.1} parent=1 // pred_check_branch
      %134 = sbr.rel (0) target = $region25
    $region24: #{tpu_custom_call.1} parent=1 // pred_region
      %s136 = ssub.s32 128, 128
      %137 = vsyncadd [#allocation4], %s136
      %s139 = sshll.u32 [#allocation7], 4
      %s140 = int_to_ptr.vmem [resolvable:$true] %s139
      %142 = dma.vmem_to_hbm [thread:$0]  %s140, 128, %s3, [#allocation4]
    $region25: #{tpu_custom_call.1} parent=1 // pred_fallthru
      _
    // Predicated region
    $region26: #{tpu_custom_call.1} parent=1 // pred_check
      _
    $region27: #{tpu_custom_call.1} parent=1 // pred_check_branch
      %144 = sbr.rel (0) target = $region29
    $region28: #{tpu_custom_call.1} parent=1 // pred_region
      %145 = dma.done [#allocation4], 128
    $region29: #{tpu_custom_call.1} parent=1 // pred_fallthru
      _
    %146 = vsyncpa [#allocation3], 1
    %147 = vsyncpa [#allocation6], 1
    %148 = vsyncpa [#allocation4], 1

</llo_original>
